<compile_context>
chip_gen: v5e
topology: v5e:2x2
jax: 0.10.0
libtpu: 0.0.40
codegen_flags: <defaults>
</compile_context>

<pallas_src>
import functools
import numpy as np
import jax
import jax.numpy as jnp
from jax import lax
from jax.experimental import pallas as pl
from jax.experimental.pallas import tpu as pltpu


# --------------------------------------------------------------------------
# kernels
# --------------------------------------------------------------------------
def _proj_kernel(feat_ref, feat_a_ref, w1_ref, p_ref):
    """p = [feat @ w1 | feat_a @ w1]   (row tile, bf16 out, f32 accumulation).
    dropout p=0.0 -> identity."""
    w1 = w1_ref[...]
    zw = jnp.dot(feat_ref[...], w1, preferred_element_type=jnp.float32)
    zw_a = jnp.dot(feat_a_ref[...], w1, preferred_element_type=jnp.float32)
    p_ref[...] = jnp.concatenate([zw, zw_a], axis=1).astype(p_ref.dtype)


def _hop1_kernel(adj_ref, p_ref, hidden_ref, emb_cat_ref, z_ref, *, f_out):
    """First adjacency hop, fused for (feat, feat_a):
         z_cat = adj_blk @ [zw | zw_a]
       hidden = z (pre-activation), emb_cat = relu(z_cat), z (bf16) -> hop 2."""
    z_cat = jnp.dot(adj_ref[...], p_ref[...],
                    preferred_element_type=jnp.float32)
    z = z_cat[:, :f_out]
    hidden_ref[...] = z
    emb_cat_ref[...] = jnp.maximum(z_cat, 0.0).astype(emb_cat_ref.dtype)  # relu
    z_ref[...] = z.astype(z_ref.dtype)


def _hop2_readout_disc_kernel(adj_ref, gneigh_ref, z_ref, emb_cat_ref,
                              emb_blk_ref, w2_ref, wd_blk_ref, inv_row_ref,
                              bias_ref, h_ref, ret_ref, ret_a_ref, *, f_out):
    # --- second hop:  h = relu(adj @ z @ w2)  -------------------------------
    # Associativity lets the NxN matmul contract at width F_out (not F_in).
    zz = jnp.dot(adj_ref[...], z_ref[...], preferred_element_type=jnp.float32)
    h = jnp.dot(zz.astype(jnp.bfloat16), w2_ref[...],
                preferred_element_type=jnp.float32)
    # clip=None -> no quantile threshold; then h[h < 0] = 0
    # TODO(synk): torch.quantile (clip != None path) has no clean in-kernel equivalent
    h_ref[...] = jnp.maximum(h, 0.0)

    # --- AvgReadout(mask=graph_neigh), fused for emb / emb_a, + L2 norm + sigmoid
    ge_cat = jnp.dot(gneigh_ref[...], emb_cat_ref[...],
                     preferred_element_type=jnp.float32) * inv_row_ref[...]

    def norm_sigmoid(x):
        sumsq = jnp.sum(x * x, axis=1, keepdims=True)
        x = x * lax.rsqrt(jnp.maximum(sumsq, 1e-24))            # F.normalize eps
        return pl.reciprocal(1.0 + jnp.exp(-x), approx=True)    # sigmoid on EUP

    g = norm_sigmoid(ge_cat[:, :f_out])
    g_a = norm_sigmoid(ge_cat[:, f_out:])

    # --- Discriminator: per-row bilinear scores.
    # Both wd projections are computed ONCE via a single block-diag(wd) matmul
    # and reused for ret and ret_a.
    ewd_cat = jnp.dot(emb_blk_ref[...], wd_blk_ref[...],
                      preferred_element_type=jnp.float32)  # [emb@wd | emb_a@wd]
    ewd = ewd_cat[:, :f_out]
    eawd = ewd_cat[:, f_out:]

    bias = bias_ref[...]                                # (1,1), broadcasts
    ret_ref[:, 0:1] = jnp.sum(ewd * g, axis=1, keepdims=True) + bias
    ret_ref[:, 1:2] = jnp.sum(eawd * g, axis=1, keepdims=True) + bias
    ret_a_ref[:, 0:1] = jnp.sum(eawd * g_a, axis=1, keepdims=True) + bias
    ret_a_ref[:, 1:2] = jnp.sum(ewd * g_a, axis=1, keepdims=True) + bias


# --------------------------------------------------------------------------
# wrapper
# --------------------------------------------------------------------------
def _pick_tile(n, target=256):
    """Largest multiple-of-8 divisor of n that is <= target (else whole n)."""
    if n <= target:
        return n
    for tm in range(target, 7, -8):
        if n % tm == 0:
            return tm
    return n


def _default_vmem_limit():
    # Stay well inside physical VMEM on every generation (v7x: 64 MiB/TC).
    try:
        cap = int(pltpu.get_tpu_info().vmem_capacity_bytes)
    except Exception:
        cap = 64 << 20
    return min((cap * 3) // 4, 96 << 20)


def encoder_forward(feat, feat_a, adj, graph_neigh, w1, w2, wd, bias,
                    *, block_rows=256, vmem_limit_bytes=None):
    N, F_in = feat.shape
    F_out = w1.shape[1]
    TM = _pick_tile(N, block_rows)
    nblk = N // TM

    bf16, f32 = jnp.bfloat16, jnp.float32

    # bf16 MXU operands (f32 accumulation inside the kernels)
    feat_b = feat.astype(bf16)
    feat_a_b = feat_a.astype(bf16)
    adj_b = adj.astype(bf16)
    gneigh_b = graph_neigh.astype(bf16)
    w1_b = w1.astype(bf16)
    w2_b = w2.astype(bf16)
    # block-diag(wd, wd): one 2*F_out-wide matmul yields both emb@wd and emb_a@wd
    zpad = jnp.zeros_like(wd)
    wd_blk = jnp.concatenate(
        [jnp.concatenate([wd, zpad], axis=1),
         jnp.concatenate([zpad, wd], axis=1)], axis=0).astype(bf16)

    # AvgReadout row normalizer precomputed once; eps guards an all-zero row
    inv_row = (1.0 / jnp.maximum(
        jnp.sum(graph_neigh.astype(f32), axis=1, keepdims=True), 1e-12)).astype(f32)
    bias2 = jnp.reshape(bias.astype(f32), (1, 1))

    if vmem_limit_bytes is None:
        vmem_limit_bytes = _default_vmem_limit()
    cparams = pltpu.CompilerParams(
        dimension_semantics=("parallel",),
        vmem_limit_bytes=vmem_limit_bytes)

    # ---- stage 1: projections p = [feat@w1 | feat_a@w1] --------------------
    p_cat = pl.pallas_call(
        _proj_kernel,
        grid=(nblk,),
        in_specs=[
            pl.BlockSpec((TM, F_in), lambda i: (i, 0)),
            pl.BlockSpec((TM, F_in), lambda i: (i, 0)),
            pl.BlockSpec((F_in, F_out), lambda i: (0, 0)),
        ],
        out_specs=pl.BlockSpec((TM, 2 * F_out), lambda i: (i, 0)),
        out_shape=jax.ShapeDtypeStruct((N, 2 * F_out), bf16),
        compiler_params=cparams,
    )(feat_b, feat_a_b, w1_b)

    # ---- stage 2: first adjacency hop (adj read once, fused RHS) -----------
    hidden, emb_cat, z_b = pl.pallas_call(
        functools.partial(_hop1_kernel, f_out=F_out),
        grid=(nblk,),
        in_specs=[
            pl.BlockSpec((TM, N), lambda i: (i, 0)),           # adj row block
            pl.BlockSpec((N, 2 * F_out), lambda i: (0, 0)),    # full projections
        ],
        out_specs=(
            pl.BlockSpec((TM, F_out), lambda i: (i, 0)),
            pl.BlockSpec((TM, 2 * F_out), lambda i: (i, 0)),
            pl.BlockSpec((TM, F_out), lambda i: (i, 0)),
        ),
        out_shape=(
            jax.ShapeDtypeStruct((N, F_out), f32),       # hidden_emb
            jax.ShapeDtypeStruct((N, 2 * F_out), bf16),  # [emb | emb_a]
            jax.ShapeDtypeStruct((N, F_out), bf16),      # z (bf16) for hop 2
        ),
        compiler_params=cparams,
    )(adj_b, p_cat)

    # ---- stage 3: second hop + readout + discriminator ---------------------
    h, ret, ret_a = pl.pallas_call(
        functools.partial(_hop2_readout_disc_kernel, f_out=F_out),
        grid=(nblk,),
        in_specs=[
            pl.BlockSpec((TM, N), lambda i: (i, 0)),           # adj row block
            pl.BlockSpec((TM, N), lambda i: (i, 0)),           # graph_neigh row block
            pl.BlockSpec((N, F_out), lambda i: (0, 0)),        # full z (bf16)
            pl.BlockSpec((N, 2 * F_out), lambda i: (0, 0)),    # full [emb|emb_a]
            pl.BlockSpec((TM, 2 * F_out), lambda i: (i, 0)),   # this block's emb rows
            pl.BlockSpec((F_out, F_in), lambda i: (0, 0)),     # w2
            pl.BlockSpec((2 * F_out, 2 * F_out), lambda i: (0, 0)),  # blkdiag(wd)
            pl.BlockSpec((TM, 1), lambda i: (i, 0)),           # 1/row_sum
            pl.BlockSpec((1, 1), lambda i: (0, 0)),            # bilinear bias
        ],
        out_specs=(
            pl.BlockSpec((TM, F_in), lambda i: (i, 0)),
            pl.BlockSpec((TM, 2), lambda i: (i, 0)),
            pl.BlockSpec((TM, 2), lambda i: (i, 0)),
        ),
        out_shape=(
            jax.ShapeDtypeStruct((N, F_in), f32),   # h
            jax.ShapeDtypeStruct((N, 2), f32),      # ret
            jax.ShapeDtypeStruct((N, 2), f32),      # ret_a
        ),
        compiler_params=cparams,
    )(adj_b, gneigh_b, z_b, emb_cat, emb_cat, w2_b, wd_blk, inv_row, bias2)

    return hidden, h, ret, ret_a


# ---------------- pure-JAX reference (for correctness check) ----------------
def encoder_reference(feat, feat_a, adj, graph_neigh, w1, w2, wd, bias):
    mm = lambda a, b: jnp.dot(a, b, preferred_element_type=jnp.float32)
    z = mm(adj, mm(feat, w1))
    hidden = z
    h = jnp.maximum(mm(adj, mm(z, w2)), 0.0)
    emb = jnp.maximum(z, 0.0)
    emb_a = jnp.maximum(mm(adj, mm(feat_a, w1)), 0.0)
    row_sum = jnp.maximum(jnp.sum(graph_neigh, axis=1, keepdims=True), 1e-12)

    def readout(e):
        ge = mm(graph_neigh, e) / row_sum
        nrm = jnp.maximum(jnp.sqrt(jnp.sum(ge * ge, axis=1, keepdims=True)), 1e-12)
        return jax.nn.sigmoid(ge / nrm)

    g, g_a = readout(emb), readout(emb_a)
    bil = lambda x1, x2: jnp.sum(mm(x1, wd) * x2, axis=1, keepdims=True) + bias[0]
    ret = jnp.concatenate([bil(emb, g), bil(emb_a, g)], axis=1)
    ret_a = jnp.concatenate([bil(emb_a, g_a), bil(emb, g_a)], axis=1)
    return hidden, h, ret, ret_a


def xavier_uniform(key, shape):
    bound = float(np.sqrt(6.0 / (shape[0] + shape[1])))
    return jax.random.uniform(key, shape, jnp.float32, -bound, bound)


if __name__ == "__main__":
    N, F_in, F_out = 256, 64, 32
    key = jax.random.PRNGKey(0)
    k = jax.random.split(key, 8)

    feat = jax.random.normal(k[0], (N, F_in), jnp.float32)
    feat_a = jax.random.normal(k[1], (N, F_in), jnp.float32)

    # adjacency (row-normalized) and graph_neigh mask (binary with self-loops)
    a_raw = (jax.random.uniform(k[2], (N, N)) < 0.3).astype(jnp.float32) + jnp.eye(N)
    a_raw = jnp.minimum(a_raw, 1.0)
    adj = a_raw / jnp.sum(a_raw, axis=1, keepdims=True)
    graph_neigh = jnp.minimum(
        (jax.random.uniform(k[3], (N, N)) < 0.3).astype(jnp.float32) + jnp.eye(N), 1.0)

    # deterministic parameter init (matches __init__ shapes; xavier uniform, bias=0)
    w1 = xavier_uniform(k[4], (F_in, F_out))
    w2 = xavier_uniform(k[5], (F_out, F_in))
    wd = xavier_uniform(k[6], (F_out, F_out))   # nn.Bilinear(nf, nf, 1) weight (squeezed)
    bias = jnp.zeros((1,), jnp.float32)         # nn.Bilinear bias

    outs = encoder_forward(feat, feat_a, adj, graph_neigh, w1, w2, wd, bias,
                           block_rows=128)      # -> grid of 2 row blocks
    outs = jax.block_until_ready(outs)

    refs = encoder_reference(feat, feat_a, adj, graph_neigh, w1, w2, wd, bias)
    names = ("hidden_emb", "h", "ret", "ret_a")
    for name, o, r in zip(names, outs, refs):
        if not np.allclose(np.asarray(o), np.asarray(r), rtol=5e-2, atol=5e-2):
            raise AssertionError(f"mismatch in {name}")

    print("KERNEL_OK")
</pallas_src>

<mosaic_0001>
module attributes {stable_mosaic.version = 11 : i64} {
  func.func @_proj_kernel(%arg0: i32, %arg1: memref<128x64xbf16, #tpu.memory_space<vmem>>, %arg2: memref<128x64xbf16, #tpu.memory_space<vmem>>, %arg3: memref<64x32xbf16, #tpu.memory_space<vmem>>, %arg4: memref<128x64xbf16, #tpu.memory_space<vmem>>) attributes {dimension_semantics = [#tpu.dimension_semantics<parallel>], iteration_bounds = array<i64: 2>, scalar_prefetch = 0 : i64, scratch_operands = 0 : i64, tpu.core_type = #tpu.core_type<tc>, window_params = [{transform_indices = @transform_0, window_bounds = array<i64: 128, 64>}, {transform_indices = @transform_1, window_bounds = array<i64: 128, 64>}, {pipeline_mode = #tpu.pipeline_mode<synchronous>, transform_indices = @transform_2, window_bounds = array<i64: 64, 32>}, {transform_indices = @transform_3, window_bounds = array<i64: 128, 64>}]} {
    %c0 = arith.constant 0 : index
    %c0_0 = arith.constant 0 : index
    %0 = vector.load %arg3[%c0, %c0_0] : memref<64x32xbf16, #tpu.memory_space<vmem>>, vector<64x32xbf16>
    %c0_1 = arith.constant 0 : index
    %c0_2 = arith.constant 0 : index
    %1 = vector.load %arg1[%c0_1, %c0_2] : memref<128x64xbf16, #tpu.memory_space<vmem>>, vector<128x64xbf16>
    %cst = arith.constant dense<0.000000e+00> : vector<128x32xf32>
    %2 = tpu.matmul %1, %0, %cst {dimension_numbers = #tpu.dot_dimension_numbers<[1], [0], [0], [1], [0, 0, 1, 1], [], []>} : vector<128x64xbf16>, vector<64x32xbf16>, vector<128x32xf32> -> vector<128x32xf32>
    %c0_3 = arith.constant 0 : index
    %c0_4 = arith.constant 0 : index
    %3 = vector.load %arg2[%c0_3, %c0_4] : memref<128x64xbf16, #tpu.memory_space<vmem>>, vector<128x64xbf16>
    %cst_5 = arith.constant dense<0.000000e+00> : vector<128x32xf32>
    %4 = tpu.matmul %3, %0, %cst_5 {dimension_numbers = #tpu.dot_dimension_numbers<[1], [0], [0], [1], [0, 0, 1, 1], [], []>} : vector<128x64xbf16>, vector<64x32xbf16>, vector<128x32xf32> -> vector<128x32xf32>
    %5 = tpu.concatenate %2, %4 in 1 : vector<128x32xf32>, vector<128x32xf32> -> vector<128x64xf32>
    %6 = arith.truncf %5 : vector<128x64xf32> to vector<128x64xbf16>
    %c0_6 = arith.constant 0 : index
    %c0_7 = arith.constant 0 : index
    %7 = vector.load %arg4[%c0_6, %c0_7] : memref<128x64xbf16, #tpu.memory_space<vmem>>, vector<128x64xbf16>
    tpu.vector_store %arg4[%c0_6, %c0_7], %6 {strides = array<i32>} : memref<128x64xbf16, #tpu.memory_space<vmem>>, vector<128x64xbf16>,
    return
  }
  func.func @transform_0(%arg0: i32) -> (i32, i32) {
    %c0_i32 = arith.constant 0 : i32
    %c0_i32_0 = arith.constant 0 : i32
    return %arg0, %c0_i32 : i32, i32
  }
  func.func @transform_1(%arg0: i32) -> (i32, i32) {
    %c0_i32 = arith.constant 0 : i32
    %c0_i32_0 = arith.constant 0 : i32
    return %arg0, %c0_i32 : i32, i32
  }
  func.func @transform_2(%arg0: i32) -> (i32, i32) {
    %c0_i32 = arith.constant 0 : i32
    %c0_i32_0 = arith.constant 0 : i32
    %c0_i32_1 = arith.constant 0 : i32
    return %c0_i32, %c0_i32_0 : i32, i32
  }
  func.func @transform_3(%arg0: i32) -> (i32, i32) {
    %c0_i32 = arith.constant 0 : i32
    %c0_i32_0 = arith.constant 0 : i32
    return %arg0, %c0_i32 : i32, i32
  }
}

</mosaic_0001>

<llo_original>
// kernel: tpu_custom_call.1
$region0: #{tpu_custom_call.1}
  #allocation0 [shape = 'u32[]', space=smem, size = 0x4, offset = 0x4, fixed_abs, tag = 'smem constant byte address 0x4 - core index']
  #allocation1 [shape = 'u32[72,128]{1,0:T(1,128)}', space=vmem, size = 0x9000, scoped, tag = 'internal scratch']
  %s0 = inlined_call_operand.vmem [shape: bf16[256,64], index: 0, kind: input, shape index: {}]
  %s1 = inlined_call_operand.vmem [shape: bf16[256,64], index: 1, kind: input, shape index: {}]
  %s2 = inlined_call_operand.vmem [shape: bf16[64,32], index: 2, kind: input, shape index: {}]
  %s3 = inlined_call_operand.vmem [shape: bf16[256,64], index: 3, kind: output, shape index: {}]
  %s4 = sld [smem:[#allocation0]]
  $region45: #{tpu_custom_call.1} parent=0
    _
  %s6 = ssub.s32 1, %s4
  %s7 = scalar_select 0, %s6, %s4
  loop: start=0, step=1, limit=4
  $region2: #{tpu_custom_call.1} parent=0 // loop_pre_header
    _
  $region3: #{tpu_custom_call.1} parent=0 // loop_header
    %s9 = sphi 0, %s13
    %p10 = scmp.ge.s32.totalorder %s9, 4
    %s19 = sphi 0, %s21
    %s22 = sphi 0, %s19
    %s23 = sphi 0, %s22
    %s39 = sphi 0, %s23
    %s45 = sphi 0, %s47
    %s48 = sphi 0, %s45
    %s49 = sphi 0, %s48
    %s65 = sphi 0, %s49
    %s69 = sphi 0, %s69
    %s71 = sphi 0, %s69
    %s72 = sphi 0, %s71
    %s86 = sphi 0, %s72
    %s92 = sphi 0, %s94
    %s95 = sphi 0, %s92
    %s96 = sphi 0, %s95
    %s112 = sphi 0, %s96
  $region4: #{tpu_custom_call.1} parent=0 // loop_header_branch
    %12 = sbr.rel (%p10) target = $region8
  $region5: #{tpu_custom_call.1} parent=0 // loop_body
    %s14 = ssub.s32 %s9, 1
    %s15 = ssub.s32 %s9, 2
    %s16 = sadd.s32 %s9, 1
    %s17 = ssub.s32 %s9, %s16
    %p18 = scmp.eq.s32.totalorder %s17, 0
    %s20 = sadd.s32 %s19, 1
    %s21 = scalar_select %p18, %s19, %s20
    %p24 = pneg %p18
    %p25 = scmp.eq.s32.totalorder %s9, 1
    %p26 = por %p24, %p25
    %p27 = scmp.ne.s32.totalorder %s19, %s22
    %p28 = scmp.eq.s32.totalorder %s9, 0
    %p29 = por %p27, %p28
    %p30 = scmp.ne.s32.totalorder %s19, %s22
    %p31 = scmp.eq.s32.totalorder %s14, 1
    %p32 = por %p30, %p31
    %p33 = scmp.ne.s32.totalorder %s22, %s23
    %p34 = scmp.eq.s32.totalorder %s14, 0
    %p35 = por %p33, %p34
    %p36 = scmp.ne.s32.totalorder %s22, %s23
    %p37 = scmp.eq.s32.totalorder %s15, 1
    %p38 = por %p36, %p37
    %p40 = scmp.ne.s32.totalorder %s23, %s39
    %p41 = scmp.eq.s32.totalorder %s15, 0
    %p42 = por %p40, %p41
    %s43 = ssub.s32 %s9, %s16
    %p44 = scmp.eq.s32.totalorder %s43, 0
    %s46 = sadd.s32 %s45, 1
    %s47 = scalar_select %p44, %s45, %s46
    %p50 = pneg %p44
    %p51 = scmp.eq.s32.totalorder %s9, 1
    %p52 = por %p50, %p51
    %p53 = scmp.ne.s32.totalorder %s45, %s48
    %p54 = scmp.eq.s32.totalorder %s9, 0
    %p55 = por %p53, %p54
    %p56 = scmp.ne.s32.totalorder %s45, %s48
    %p57 = scmp.eq.s32.totalorder %s14, 1
    %p58 = por %p56, %p57
    %p59 = scmp.ne.s32.totalorder %s48, %s49
    %p60 = scmp.eq.s32.totalorder %s14, 0
    %p61 = por %p59, %p60
    %p62 = scmp.ne.s32.totalorder %s48, %s49
    %p63 = scmp.eq.s32.totalorder %s15, 1
    %p64 = por %p62, %p63
    %p66 = scmp.ne.s32.totalorder %s49, %s65
    %p67 = scmp.eq.s32.totalorder %s15, 0
    %p68 = por %p66, %p67
    %s70 = sadd.s32 %s69, 1
    %p73 = scmp.eq.s32.totalorder %s9, 1
    %p74 = scmp.ne.s32.totalorder %s69, %s71
    %p75 = scmp.eq.s32.totalorder %s9, 0
    %p76 = por %p74, %p75
    %p77 = scmp.ne.s32.totalorder %s69, %s71
    %p78 = scmp.eq.s32.totalorder %s14, 1
    %p79 = por %p77, %p78
    %p80 = scmp.ne.s32.totalorder %s71, %s72
    %p81 = scmp.eq.s32.totalorder %s14, 0
    %p82 = por %p80, %p81
    %p83 = scmp.ne.s32.totalorder %s71, %s72
    %p84 = scmp.eq.s32.totalorder %s15, 1
    %p85 = por %p83, %p84
    %p87 = scmp.ne.s32.totalorder %s72, %s86
    %p88 = scmp.eq.s32.totalorder %s15, 0
    %p89 = por %p87, %p88
    %s90 = ssub.s32 %s9, %s16
    %p91 = scmp.eq.s32.totalorder %s90, 0
    %s93 = sadd.s32 %s92, 1
    %s94 = scalar_select %p91, %s92, %s93
    %p97 = pneg %p91
    %p98 = scmp.eq.s32.totalorder %s9, 1
    %p99 = por %p97, %p98
    %p100 = scmp.ne.s32.totalorder %s92, %s95
    %p101 = scmp.eq.s32.totalorder %s9, 0
    %p102 = por %p100, %p101
    %p103 = scmp.ne.s32.totalorder %s92, %s95
    %p104 = scmp.eq.s32.totalorder %s14, 1
    %p105 = por %p103, %p104
    %p106 = scmp.ne.s32.totalorder %s95, %s96
    %p107 = scmp.eq.s32.totalorder %s14, 0
    %p108 = por %p106, %p107
    %p109 = scmp.ne.s32.totalorder %s95, %s96
    %p110 = scmp.eq.s32.totalorder %s15, 1
    %p111 = por %p109, %p110
    %p113 = scmp.ne.s32.totalorder %s96, %s112
    %p114 = scmp.eq.s32.totalorder %s15, 0
    %p115 = por %p113, %p114
    %p116 = scmp.le.s32.totalorder 1, %s9
    %p117 = scmp.lt.s32.totalorder %s9, 3
    %p118 = pnand %p116, %p117
    %p119 = pneg %p118
    // Predicated region
    $region9: #{tpu_custom_call.1} parent=5 // pred_check
      _
    $region10: #{tpu_custom_call.1} parent=5 // pred_check_branch
      %121 = sbr.rel (%p118) target = $region12
    $region11: #{tpu_custom_call.1} parent=5 // pred_region
      %s122 = ssub.s32 %s9, 1
      // Predicated region
      $region13: #{tpu_custom_call.1} parent=11 // pred_check
        %p123 = pneg %p82
      $region14: #{tpu_custom_call.1} parent=11 // pred_check_branch
        %125 = sbr.rel (%p123) target = $region16
      $region15: #{tpu_custom_call.1} parent=11 // pred_region
        _
      $region16: #{tpu_custom_call.1} parent=11 // pred_fallthru
        _
    $region12: #{tpu_custom_call.1} parent=5 // pred_fallthru
      _
    %p126 = scmp.lt.s32.totalorder %s9, 2
    // Predicated region
    $region17: #{tpu_custom_call.1} parent=5 // pred_check
      %p127 = pneg %p126
    $region18: #{tpu_custom_call.1} parent=5 // pred_check_branch
      %129 = sbr.rel (%p127) target = $region20
    $region19: #{tpu_custom_call.1} parent=5 // pred_region
      // Predicated region
      $region21: #{tpu_custom_call.1} parent=19 // pred_check
        %p130 = pneg %p29
      $region22: #{tpu_custom_call.1} parent=19 // pred_check_branch
        %132 = sbr.rel (%p130) target = $region24
      $region23: #{tpu_custom_call.1} parent=19 // pred_region
        %s133 = smul.u32 16, %s9
        %p134 = scmp.lt.s32.totalorder %s133, 31
        %s135 = scalar_select %p134, %s133, 31
        %s136 = smul.addr %s135, 4
        %s137 = scalar_lea.vmem %s0, %s136
        %s138 = smul.u32 16, %s9
      $region24: #{tpu_custom_call.1} parent=19 // pred_fallthru
        _
      // Predicated region
      $region25: #{tpu_custom_call.1} parent=19 // pred_check
        %p139 = pneg %p55
      $region26: #{tpu_custom_call.1} parent=19 // pred_check_branch
        %141 = sbr.rel (%p139) target = $region28
      $region27: #{tpu_custom_call.1} parent=19 // pred_region
        %s142 = smul.u32 16, %s9
        %p143 = scmp.lt.s32.totalorder %s142, 31
        %s144 = scalar_select %p143, %s142, 31
        %s145 = smul.addr %s144, 4
        %s146 = scalar_lea.vmem %s1, %s145
        %s147 = smul.u32 16, %s9
      $region28: #{tpu_custom_call.1} parent=19 // pred_fallthru
        _
    $region20: #{tpu_custom_call.1} parent=5 // pred_fallthru
      _
    %p148 = scmp.le.s32.totalorder 1, %s9
    %p149 = scmp.lt.s32.totalorder %s9, 3
    %p150 = pnand %p148, %p149
    %p151 = pneg %p150
    // Predicated region
    $region29: #{tpu_custom_call.1} parent=5 // pred_check
      _
    $region30: #{tpu_custom_call.1} parent=5 // pred_check_branch
      %153 = sbr.rel (%p150) target = $region32
    $region31: #{tpu_custom_call.1} parent=5 // pred_region
      %s154 = ssub.s32 %s9, 1
      %s155 = smul.u32 16, %s14
      %p156 = scmp.lt.s32.totalorder %s155, 31
      %s157 = scalar_select %p156, %s155, 31
      %s158 = smul.addr %s157, 4
      %s159 = scalar_lea.vmem %s0, %s158
      %p160 = pneg %p35
      %p161 = pneg %p32
      %s162 = smul.u32 16, %s14
      %p163 = scmp.lt.s32.totalorder %s162, 31
      %s164 = scalar_select %p163, %s162, 31
      %s165 = smul.addr %s164, 4
      %s166 = scalar_lea.vmem %s1, %s165
      %p167 = pneg %p61
      %p168 = pneg %p58
      %p169 = pneg %p82
      %p170 = pneg %p79
      %p171 = pneg %p108
      %p172 = pneg %p105
      %s173 = smul.u32 16, %s14
      %p174 = scmp.lt.s32.totalorder %s173, 31
      %s175 = scalar_select %p174, %s173, 31
      %s176 = smul.addr %s175, 4
      %s177 = scalar_lea.vmem %s3, %s176
      %s178 = smul.u32 16, %s14
      %p179 = scmp.lt.s32.totalorder %s178, 31
      %s180 = scalar_select %p179, %s178, 31
      %s181 = smul.addr %s180, 4
      %s182 = scalar_lea.vmem %s0, %s181
      %s183 = smul.u32 16, %s14
      %s184 = smul.u32 16, %s14
      %p185 = scmp.lt.s32.totalorder %s184, 31
      %s186 = scalar_select %p185, %s184, 31
      %s187 = smul.addr %s186, 4
      %s188 = scalar_lea.vmem %s1, %s187
      %s189 = smul.u32 16, %s14
      %s190 = smul.u32 16, %s14
      %p191 = scmp.lt.s32.totalorder %s190, 31
      %s192 = scalar_select %p191, %s190, 31
      %s193 = smul.addr %s192, 4
      %s194 = scalar_lea.vmem %s3, %s193
      %s195 = smul.u32 16, %s14
      %v197 = vld [vmem:[%s2] sm:$0xf]
      %v198 = vld [vmem:[%s2 + $0x4] sm:$0xf]
      %v199 = vld [vmem:[%s2 + $0x8] sm:$0xf]
      %v200 = vld [vmem:[%s2 + $0xc] sm:$0xf]
      %v201 = vld [vmem:[%s2 + $0x10] sm:$0xf]
      %v202 = vld [vmem:[%s2 + $0x14] sm:$0xf]
      %v203 = vld [vmem:[%s2 + $0x18] sm:$0xf]
      %v204 = vld [vmem:[%s2 + $0x1c] sm:$0xf]
      %v205 = vld [vmem:[%s182] sm:$0xf]
      %v206 = vld [vmem:[%s182 + $0x4] sm:$0xf]
      %v207 = vld [vmem:[%s182 + $0x8] sm:$0xf]
      %v208 = vld [vmem:[%s182 + $0xc] sm:$0xf]
      %v209 = vld [vmem:[%s182 + $0x10] sm:$0xf]
      %v210 = vld [vmem:[%s182 + $0x14] sm:$0xf]
      %v211 = vld [vmem:[%s182 + $0x18] sm:$0xf]
      %v212 = vld [vmem:[%s182 + $0x1c] sm:$0xf]
      %v213 = vld [vmem:[%s182 + $0x20] sm:$0xf]
      %v214 = vld [vmem:[%s182 + $0x24] sm:$0xf]
      %v215 = vld [vmem:[%s182 + $0x28] sm:$0xf]
      %v216 = vld [vmem:[%s182 + $0x2c] sm:$0xf]
      %v217 = vld [vmem:[%s182 + $0x30] sm:$0xf]
      %v218 = vld [vmem:[%s182 + $0x34] sm:$0xf]
      %v219 = vld [vmem:[%s182 + $0x38] sm:$0xf]
      %v220 = vld [vmem:[%s182 + $0x3c] sm:$0xf]
      %v237 = vunpack.c.l.b16 %v205
      %v238 = vunpack.c.l.b16 %v206
      %v239 = vunpack.c.l.b16 %v207
      %v240 = vunpack.c.l.b16 %v208
      %v241 = vunpack.c.l.b16 %v209
      %v242 = vunpack.c.l.b16 %v210
      %v243 = vunpack.c.l.b16 %v211
      %v244 = vunpack.c.l.b16 %v212
      %v245 = vunpack.c.l.b16 %v213
      %v246 = vunpack.c.l.b16 %v214
      %v247 = vunpack.c.l.b16 %v215
      %v248 = vunpack.c.l.b16 %v216
      %v249 = vunpack.c.l.b16 %v217
      %v250 = vunpack.c.l.b16 %v218
      %v251 = vunpack.c.l.b16 %v219
      %v252 = vunpack.c.l.b16 %v220
      %v253 = vpack.c.b16 %v238, %v237
      %v254 = vpack.c.b16 %v240, %v239
      %v255 = vpack.c.b16 %v242, %v241
      %v256 = vpack.c.b16 %v244, %v243
      %v257 = vpack.c.b16 %v246, %v245
      %v258 = vpack.c.b16 %v248, %v247
      %v259 = vpack.c.b16 %v250, %v249
      %v260 = vpack.c.b16 %v252, %v251
      %v269 = vunpack.c.l.b16 %v197
      %v270 = vunpack.c.l.b16 %v198
      %v271 = vunpack.c.l.b16 %v199
      %v272 = vunpack.c.l.b16 %v200
      %v273 = vunpack.c.l.b16 %v201
      %v274 = vunpack.c.l.b16 %v202
      %v275 = vunpack.c.l.b16 %v203
      %v276 = vunpack.c.l.b16 %v204
      %v277 = vpack.c.b16 %v270, %v269
      %v278 = vpack.c.b16 %v272, %v271
      %v279 = vpack.c.b16 %v274, %v273
      %v280 = vpack.c.b16 %v276, %v275
      %vm285 = vcmask 523264
      %v287 = vsel %vm285, %v253, 0
      %v290 = vsel %vm285, %v254, 0
      %v293 = vsel %vm285, %v255, 0
      %v296 = vsel %vm285, %v256, 0
      %v299 = vsel %vm285, %v257, 0
      %v302 = vsel %vm285, %v258, 0
      %v305 = vsel %vm285, %v259, 0
      %v308 = vsel %vm285, %v260, 0
      %310 = vmatpush.bf16.msra.mxu0 0
      %311 = vmatpush.bf16.msra.mxu0 0
      %312 = vmatpush.bf16.msra.mxu0 0
      %313 = vmatpush.bf16.msra.mxu0 0
      %314 = vmatpush.bf16.msra.mxu0 %v280
      %315 = vmatpush.bf16.msra.mxu0 %v279
      %316 = vmatpush.bf16.msra.mxu0 %v278
      %317 = vmatpush.bf16.msra.mxu0 %v277
      %318 = vmatmul.bf16.gmra.mxu0 %v287
      %v319 = vpop.f32.mrf.mxu0
      %v320 = vadd.f32 0.0, %v319
      %v321 = vpop.f32.mrf.mxu0
      %v322 = vadd.f32 0.0, %v321
      %323 = vmatmul.bf16.gmra.mxu0 %v290
      %v324 = vpop.f32.mrf.mxu0
      %v325 = vadd.f32 0.0, %v324
      %v326 = vpop.f32.mrf.mxu0
      %v327 = vadd.f32 0.0, %v326
      %328 = vmatmul.bf16.gmra.mxu0 %v293
      %v329 = vpop.f32.mrf.mxu0
      %v330 = vadd.f32 0.0, %v329
      %v331 = vpop.f32.mrf.mxu0
      %v332 = vadd.f32 0.0, %v331
      %333 = vmatmul.bf16.gmra.mxu0 %v296
      %v334 = vpop.f32.mrf.mxu0
      %v335 = vadd.f32 0.0, %v334
      %v336 = vpop.f32.mrf.mxu0
      %v337 = vadd.f32 0.0, %v336
      %338 = vmatmul.bf16.gmra.mxu0 %v299
      %v339 = vpop.f32.mrf.mxu0
      %v340 = vadd.f32 0.0, %v339
      %v341 = vpop.f32.mrf.mxu0
      %v342 = vadd.f32 0.0, %v341
      %343 = vmatmul.bf16.gmra.mxu0 %v302
      %v344 = vpop.f32.mrf.mxu0
      %v345 = vadd.f32 0.0, %v344
      %v346 = vpop.f32.mrf.mxu0
      %v347 = vadd.f32 0.0, %v346
      %348 = vmatmul.bf16.gmra.mxu0 %v305
      %v349 = vpop.f32.mrf.mxu0
      %v350 = vadd.f32 0.0, %v349
      %v351 = vpop.f32.mrf.mxu0
      %v352 = vadd.f32 0.0, %v351
      %353 = vmatmul.bf16.gmra.mxu0 %v308
      %v354 = vpop.f32.mrf.mxu0
      %v355 = vadd.f32 0.0, %v354
      %v356 = vpop.f32.mrf.mxu0
      %v357 = vadd.f32 0.0, %v356
      %358 = vdwg.mxu0
      %v359 = vld [vmem:[%s188] sm:$0xf]
      %v360 = vld [vmem:[%s188 + $0x4] sm:$0xf]
      %v361 = vld [vmem:[%s188 + $0x8] sm:$0xf]
      %v362 = vld [vmem:[%s188 + $0xc] sm:$0xf]
      %v363 = vld [vmem:[%s188 + $0x10] sm:$0xf]
      %v364 = vld [vmem:[%s188 + $0x14] sm:$0xf]
      %v365 = vld [vmem:[%s188 + $0x18] sm:$0xf]
      %v366 = vld [vmem:[%s188 + $0x1c] sm:$0xf]
      %v367 = vld [vmem:[%s188 + $0x20] sm:$0xf]
      %v368 = vld [vmem:[%s188 + $0x24] sm:$0xf]
      %v369 = vld [vmem:[%s188 + $0x28] sm:$0xf]
      %v370 = vld [vmem:[%s188 + $0x2c] sm:$0xf]
      %v371 = vld [vmem:[%s188 + $0x30] sm:$0xf]
      %v372 = vld [vmem:[%s188 + $0x34] sm:$0xf]
      %v373 = vld [vmem:[%s188 + $0x38] sm:$0xf]
      %v374 = vld [vmem:[%s188 + $0x3c] sm:$0xf]
      %v391 = vunpack.c.l.b16 %v359
      %v392 = vunpack.c.l.b16 %v360
      %v393 = vunpack.c.l.b16 %v361
      %v394 = vunpack.c.l.b16 %v362
      %v395 = vunpack.c.l.b16 %v363
      %v396 = vunpack.c.l.b16 %v364
      %v397 = vunpack.c.l.b16 %v365
      %v398 = vunpack.c.l.b16 %v366
      %v399 = vunpack.c.l.b16 %v367
      %v400 = vunpack.c.l.b16 %v368
      %v401 = vunpack.c.l.b16 %v369
      %v402 = vunpack.c.l.b16 %v370
      %v403 = vunpack.c.l.b16 %v371
      %v404 = vunpack.c.l.b16 %v372
      %v405 = vunpack.c.l.b16 %v373
      %v406 = vunpack.c.l.b16 %v374
      %v407 = vpack.c.b16 %v392, %v391
      %v408 = vpack.c.b16 %v394, %v393
      %v409 = vpack.c.b16 %v396, %v395
      %v410 = vpack.c.b16 %v398, %v397
      %v411 = vpack.c.b16 %v400, %v399
      %v412 = vpack.c.b16 %v402, %v401
      %v413 = vpack.c.b16 %v404, %v403
      %v414 = vpack.c.b16 %v406, %v405
      %v416 = vsel %vm285, %v407, 0
      %v419 = vsel %vm285, %v408, 0
      %v422 = vsel %vm285, %v409, 0
      %v425 = vsel %vm285, %v410, 0
      %v428 = vsel %vm285, %v411, 0
      %v431 = vsel %vm285, %v412, 0
      %v434 = vsel %vm285, %v413, 0
      %v437 = vsel %vm285, %v414, 0
      %439 = vmatpush.bf16.msra.mxu0 0
      %440 = vmatpush.bf16.msra.mxu0 0
      %441 = vmatpush.bf16.msra.mxu0 0
      %442 = vmatpush.bf16.msra.mxu0 0
      %443 = vmatpush.bf16.msra.mxu0 %v280
      %444 = vmatpush.bf16.msra.mxu0 %v279
      %445 = vmatpush.bf16.msra.mxu0 %v278
      %446 = vmatpush.bf16.msra.mxu0 %v277
      %447 = vmatmul.bf16.gmra.mxu0 %v416
      %v448 = vpop.f32.mrf.mxu0
      %v449 = vadd.f32 0.0, %v448
      %v450 = vpop.f32.mrf.mxu0
      %v451 = vadd.f32 0.0, %v450
      %452 = vmatmul.bf16.gmra.mxu0 %v419
      %v453 = vpop.f32.mrf.mxu0
      %v454 = vadd.f32 0.0, %v453
      %v455 = vpop.f32.mrf.mxu0
      %v456 = vadd.f32 0.0, %v455
      %457 = vmatmul.bf16.gmra.mxu0 %v422
      %v458 = vpop.f32.mrf.mxu0
      %v459 = vadd.f32 0.0, %v458
      %v460 = vpop.f32.mrf.mxu0
      %v461 = vadd.f32 0.0, %v460
      %462 = vmatmul.bf16.gmra.mxu0 %v425
      %v463 = vpop.f32.mrf.mxu0
      %v464 = vadd.f32 0.0, %v463
      %v465 = vpop.f32.mrf.mxu0
      %v466 = vadd.f32 0.0, %v465
      %467 = vmatmul.bf16.gmra.mxu0 %v428
      %v468 = vpop.f32.mrf.mxu0
      %v469 = vadd.f32 0.0, %v468
      %v470 = vpop.f32.mrf.mxu0
      %v471 = vadd.f32 0.0, %v470
      %472 = vmatmul.bf16.gmra.mxu0 %v431
      %v473 = vpop.f32.mrf.mxu0
      %v474 = vadd.f32 0.0, %v473
      %v475 = vpop.f32.mrf.mxu0
      %v476 = vadd.f32 0.0, %v475
      %477 = vmatmul.bf16.gmra.mxu0 %v434
      %v478 = vpop.f32.mrf.mxu0
      %v479 = vadd.f32 0.0, %v478
      %v480 = vpop.f32.mrf.mxu0
      %v481 = vadd.f32 0.0, %v480
      %482 = vmatmul.bf16.gmra.mxu0 %v437
      %v483 = vpop.f32.mrf.mxu0
      %v484 = vadd.f32 0.0, %v483
      %v485 = vpop.f32.mrf.mxu0
      %v486 = vadd.f32 0.0, %v485
      %487 = vdwg.mxu0
      %504 = vrot.lane.b32.xlu0 %v449, 32
      %v505 = vpop.permute.xlu0 %504
      %506 = vrot.lane.b32.xlu0 %v451, 32
      %v507 = vpop.permute.xlu0 %506
      %508 = vrot.lane.b32.xlu0 %v454, 32
      %v509 = vpop.permute.xlu0 %508
      %510 = vrot.lane.b32.xlu0 %v456, 32
      %v511 = vpop.permute.xlu0 %510
      %512 = vrot.lane.b32.xlu0 %v459, 32
      %v513 = vpop.permute.xlu0 %512
      %514 = vrot.lane.b32.xlu0 %v461, 32
      %v515 = vpop.permute.xlu0 %514
      %516 = vrot.lane.b32.xlu0 %v464, 32
      %v517 = vpop.permute.xlu0 %516
      %518 = vrot.lane.b32.xlu0 %v466, 32
      %v519 = vpop.permute.xlu0 %518
      %520 = vrot.lane.b32.xlu0 %v469, 32
      %v521 = vpop.permute.xlu0 %520
      %522 = vrot.lane.b32.xlu0 %v471, 32
      %v523 = vpop.permute.xlu0 %522
      %524 = vrot.lane.b32.xlu0 %v474, 32
      %v525 = vpop.permute.xlu0 %524
      %526 = vrot.lane.b32.xlu0 %v476, 32
      %v527 = vpop.permute.xlu0 %526
      %528 = vrot.lane.b32.xlu0 %v479, 32
      %v529 = vpop.permute.xlu0 %528
      %530 = vrot.lane.b32.xlu0 %v481, 32
      %v531 = vpop.permute.xlu0 %530
      %532 = vrot.lane.b32.xlu0 %v484, 32
      %v533 = vpop.permute.xlu0 %532
      %534 = vrot.lane.b32.xlu0 %v486, 32
      %v535 = vpop.permute.xlu0 %534
      %vm552 = vcmask 261120
      %v553 = vsel %vm552, %v320, %v505
      %v554 = vsel %vm552, %v322, %v507
      %v555 = vsel %vm552, %v325, %v509
      %v556 = vsel %vm552, %v327, %v511
      %v557 = vsel %vm552, %v330, %v513
      %v558 = vsel %vm552, %v332, %v515
      %v559 = vsel %vm552, %v335, %v517
      %v560 = vsel %vm552, %v337, %v519
      %v561 = vsel %vm552, %v340, %v521
      %v562 = vsel %vm552, %v342, %v523
      %v563 = vsel %vm552, %v345, %v525
      %v564 = vsel %vm552, %v347, %v527
      %v565 = vsel %vm552, %v350, %v529
      %v566 = vsel %vm552, %v352, %v531
      %v567 = vsel %vm552, %v355, %v533
      %v568 = vsel %vm552, %v357, %v535
      %v569 = vpack.c.bf16 %v553, %v553
      %v570 = vpack.c.bf16 %v554, %v554
      %v571 = vpack.c.bf16 %v555, %v555
      %v572 = vpack.c.bf16 %v556, %v556
      %v573 = vpack.c.bf16 %v557, %v557
      %v574 = vpack.c.bf16 %v558, %v558
      %v575 = vpack.c.bf16 %v559, %v559
      %v576 = vpack.c.bf16 %v560, %v560
      %v577 = vpack.c.bf16 %v561, %v561
      %v578 = vpack.c.bf16 %v562, %v562
      %v579 = vpack.c.bf16 %v563, %v563
      %v580 = vpack.c.bf16 %v564, %v564
      %v581 = vpack.c.bf16 %v565, %v565
      %v582 = vpack.c.bf16 %v566, %v566
      %v583 = vpack.c.bf16 %v567, %v567
      %v584 = vpack.c.bf16 %v568, %v568
      %vm585 = vcmask 519168
      %586 = vst.msk [vmem:[%s194] sm:$0xf] %vm585, %v569
      %587 = vst.msk [vmem:[%s194 + $0x4] sm:$0xf] %vm585, %v570
      %588 = vst.msk [vmem:[%s194 + $0x8] sm:$0xf] %vm585, %v571
      %589 = vst.msk [vmem:[%s194 + $0xc] sm:$0xf] %vm585, %v572
      %590 = vst.msk [vmem:[%s194 + $0x10] sm:$0xf] %vm585, %v573
      %591 = vst.msk [vmem:[%s194 + $0x14] sm:$0xf] %vm585, %v574
      %592 = vst.msk [vmem:[%s194 + $0x18] sm:$0xf] %vm585, %v575
      %593 = vst.msk [vmem:[%s194 + $0x1c] sm:$0xf] %vm585, %v576
      %594 = vst.msk [vmem:[%s194 + $0x20] sm:$0xf] %vm585, %v577
      %595 = vst.msk [vmem:[%s194 + $0x24] sm:$0xf] %vm585, %v578
      %596 = vst.msk [vmem:[%s194 + $0x28] sm:$0xf] %vm585, %v579
      %597 = vst.msk [vmem:[%s194 + $0x2c] sm:$0xf] %vm585, %v580
      %598 = vst.msk [vmem:[%s194 + $0x30] sm:$0xf] %vm585, %v581
      %599 = vst.msk [vmem:[%s194 + $0x34] sm:$0xf] %vm585, %v582
      %600 = vst.msk [vmem:[%s194 + $0x38] sm:$0xf] %vm585, %v583
      %601 = vst.msk [vmem:[%s194 + $0x3c] sm:$0xf] %vm585, %v584
      %s602 = smul.u32 16, %s14
      %p603 = scmp.lt.s32.totalorder %s602, 31
      %s604 = scalar_select %p603, %s602, 31
      %s605 = smul.addr %s604, 4
      %s606 = scalar_lea.vmem %s3, %s605
      // Predicated region
      $region33: #{tpu_custom_call.1} parent=31 // pred_check
        %p607 = pneg %p105
      $region34: #{tpu_custom_call.1} parent=31 // pred_check_branch
        %609 = sbr.rel (%p607) target = $region36
      $region35: #{tpu_custom_call.1} parent=31 // pred_region
        %s610 = smul.u32 16, %s14
      $region36: #{tpu_custom_call.1} parent=31 // pred_fallthru
        _
    $region32: #{tpu_custom_call.1} parent=5 // pred_fallthru
      _
    %p611 = scmp.le.s32.totalorder 2, %s9
    // Predicated region
    $region37: #{tpu_custom_call.1} parent=5 // pred_check
      %p612 = pneg %p611
    $region38: #{tpu_custom_call.1} parent=5 // pred_check_branch
      %614 = sbr.rel (%p612) target = $region40
    $region39: #{tpu_custom_call.1} parent=5 // pred_region
      %s615 = ssub.s32 %s9, 2
      // Predicated region
      $region41: #{tpu_custom_call.1} parent=39 // pred_check
        %p616 = pneg %p111
      $region42: #{tpu_custom_call.1} parent=39 // pred_check_branch
        %618 = sbr.rel (%p616) target = $region44
      $region43: #{tpu_custom_call.1} parent=39 // pred_region
        %s619 = smul.u32 16, %s15
        %p620 = scmp.lt.s32.totalorder %s619, 31
        %s621 = scalar_select %p620, %s619, 31
        %s622 = smul.addr %s621, 4
        %s623 = scalar_lea.vmem %s3, %s622
      $region44: #{tpu_custom_call.1} parent=39 // pred_fallthru
        _
    $region40: #{tpu_custom_call.1} parent=5 // pred_fallthru
      _
  $region6: #{tpu_custom_call.1} parent=0 // loop_footer
    %s13 = sadd.s32 1, %s9
  $region7: #{tpu_custom_call.1} parent=0 // loop_footer_branch
    %8 = sbr.rel target = $region3
  $region8: #{tpu_custom_call.1} parent=0 // loop_exit
    _

</llo_original>
